<compile_context>
chip_gen: v5e
topology: v5e:2x2
jax: 0.10.0
libtpu: 0.0.40
codegen_flags: <defaults>
</compile_context>

<pallas_src>
import functools

import jax
import jax.numpy as jnp
from jax.experimental import pallas as pl
from jax.experimental.pallas import tpu as pltpu


def _round_up(x, m):
    return (x + m - 1) // m * m


def _vmem_cap_bytes():
    """Physical VMEM capacity if queryable, else a conservative 64 MiB."""
    try:
        info = pltpu.get_tpu_info()
        cap = int(getattr(info, "vmem_capacity_bytes", 0))
        if cap > 0:
            return cap
    except Exception:
        pass
    return 64 << 20


def _ffn_kernel(x_ref, w1_ref, b1_ref, w2_ref, b2_ref, *rest,
                drop_threshold, keep_scale):
    # x_ref:  (tm, dim_p)    w1_ref: (dim_p, tk)   b1_ref: (1, tk)
    # w2_ref: (tk, dim_p)    b2_ref: (1, dim_p)    [bits_ref: (tm, tk) u32]
    # o_ref:  (tm, dim_p)    acc_ref: (tm, dim_p) f32, resident across k.
    if drop_threshold is not None:
        bits_ref, o_ref, acc_ref = rest
    else:
        bits_ref = None
        o_ref, acc_ref = rest

    k = pl.program_id(1)
    nk = pl.num_programs(1)

    @pl.when(k == 0)
    def _():
        acc_ref[...] = jnp.zeros_like(acc_ref)

    # --- W_1(x) + b1, ReLU (this inner-dim tile) ------------------------------
    h = jnp.dot(x_ref[...], w1_ref[...], preferred_element_type=jnp.float32)
    h = jnp.maximum(h + b1_ref[...], 0.0)

    # --- dropout mask (keep-scale is applied once at finalize; W2 is linear) --
    if bits_ref is not None:
        keep = bits_ref[...] >= jnp.uint32(drop_threshold)
        h = jnp.where(keep, h, jnp.float32(0.0))

    # --- partial W_2 contraction, accumulated in f32 --------------------------
    acc_ref[...] += jnp.dot(h.astype(w2_ref.dtype), w2_ref[...],
                            preferred_element_type=jnp.float32)

    @pl.when(k == nk - 1)
    def _():
        acc = acc_ref[...]
        if keep_scale != 1.0:
            acc = acc * jnp.float32(keep_scale)
        o_ref[...] = (acc + b2_ref[...]).astype(o_ref.dtype)


def prepare_params(w1, b1, w2, b2, *, compute_dtype=None):
    """Pad/cast the weights ONCE (lane-dense multiples of 128) for reuse.

    w1: (dim, inner), b1: (inner,), w2: (inner, dim), b2: (dim,)
    Default compute dtype is bf16 when the params are f32 (full-rate MXU with
    f32 accumulation inside the kernel).
    """
    dim, inner = w1.shape
    assert w2.shape == (inner, dim) and b1.shape == (inner,) and b2.shape == (dim,)
    if compute_dtype is None:
        compute_dtype = jnp.bfloat16 if w1.dtype == jnp.float32 else w1.dtype

    dim_p = _round_up(dim, 128)
    inner_p = _round_up(inner, 128)

    w1_p = jnp.pad(w1, ((0, dim_p - dim), (0, inner_p - inner))).astype(compute_dtype)
    w2_p = jnp.pad(w2, ((0, inner_p - inner), (0, dim_p - dim))).astype(compute_dtype)
    b1_p = jnp.pad(b1, (0, inner_p - inner)).astype(jnp.float32).reshape(1, inner_p)
    b2_p = jnp.pad(b2, (0, dim_p - dim)).astype(jnp.float32).reshape(1, dim_p)

    return dict(w1=w1_p, b1=b1_p, w2=w2_p, b2=b2_p,
                dim=dim, inner=inner, dim_p=dim_p, inner_p=inner_p,
                compute_dtype=compute_dtype)


def feed_forward(x, params, *, dropout_rate=0.0, training=False, seed=0,
                 tm=256, tk=512):
    """x: (..., dim). params: output of prepare_params()."""
    w1_p, b1_p, w2_p, b2_p = params["w1"], params["b1"], params["w2"], params["b2"]
    dim, inner = params["dim"], params["inner"]
    dim_p, inner_p = params["dim_p"], params["inner_p"]
    xw_dtype = params["compute_dtype"]

    orig_shape = x.shape
    assert orig_shape[-1] == dim, "last dim of x must match the FFN width"
    xm = x.reshape(-1, dim)
    M = xm.shape[0]
    out_dtype = x.dtype

    # ---- dropout configuration -----------------------------------------------
    p = float(dropout_rate)
    if training and p >= 1.0:
        # torch: dropout(p=1) zeroes the hidden activation -> output is b2.
        drop_threshold, keep_scale = None, 0.0
    elif training and p > 0.0:
        drop_threshold = min(int(p * (2.0 ** 32)), 2 ** 32 - 1)
        keep_scale = 1.0 / (1.0 - p)
    else:
        drop_threshold, keep_scale = None, 1.0

    # ---- tile sizes (lane/sublane friendly) -----------------------------------
    tm_eff = max(8, min(_round_up(int(tm), 8), _round_up(M, 8)))
    # Guarantee >= 2 row blocks (megacore / 2-TC chips) when there are enough rows.
    if (M + tm_eff - 1) // tm_eff < 2 and M >= 16:
        tm_eff = min(tm_eff, max(8, _round_up((M + 1) // 2, 8)))

    # Largest multiple of 128 <= tk that divides inner_p.
    tk_eff = min(max(_round_up(int(tk), 128), 128), inner_p)
    while inner_p % tk_eff:
        tk_eff -= 128
    tk_eff = max(tk_eff, 128)

    # ---- VMEM budget: shrink tiles until the working set fits -----------------
    xb = jnp.dtype(xw_dtype).itemsize
    ob = jnp.dtype(out_dtype).itemsize
    cap = _vmem_cap_bytes()
    budget = max(cap - (12 << 20), 32 << 20)   # headroom for compiler temps

    def tiles_bytes(tm_, tk_):
        b = (2 * tm_ * dim_p * xb          # x tiles (double-buffered)
             + 2 * dim_p * tk_ * xb        # w1 tiles
             + 2 * tk_ * dim_p * xb        # w2 tiles
             + 2 * (tk_ + dim_p) * 4       # bias tiles
             + 2 * tm_ * dim_p * ob        # out tiles
             + tm_ * dim_p * 4             # f32 accumulator
             + tm_ * tk_ * 4)              # h intermediate
        if drop_threshold is not None:
            b += 2 * tm_ * tk_ * 4         # random-bits tiles
        return b

    while tiles_bytes(tm_eff, tk_eff) > budget and tk_eff > 128:
        nxt = tk_eff - 128
        while inner_p % nxt:
            nxt -= 128
        tk_eff = max(nxt, 128)
    while tiles_bytes(tm_eff, tk_eff) > budget and tm_eff > 8:
        tm_eff = max(8, _round_up(tm_eff // 2, 8))

    M_p = _round_up(M, tm_eff)
    n_row_blocks = M_p // tm_eff
    n_k_blocks = inner_p // tk_eff

    # ---- per-call input padding / cast (x only; weights are prepared once) ----
    xm_p = xm
    if M_p != M or dim_p != dim:
        xm_p = jnp.pad(xm, ((0, M_p - M), (0, dim_p - dim)))
    xm_p = xm_p.astype(xw_dtype)

    inputs = [xm_p, w1_p, b1_p, w2_p, b2_p]
    in_specs = [
        pl.BlockSpec((tm_eff, dim_p), lambda i, k: (i, 0)),
        pl.BlockSpec((dim_p, tk_eff), lambda i, k: (0, k)),
        pl.BlockSpec((1, tk_eff), lambda i, k: (0, k)),
        pl.BlockSpec((tk_eff, dim_p), lambda i, k: (k, 0)),
        pl.BlockSpec((1, dim_p), lambda i, k: (0, 0)),
    ]
    if drop_threshold is not None:
        key = jax.random.PRNGKey(int(seed))
        bits = jax.random.bits(key, (M_p, inner_p), dtype=jnp.uint32)
        inputs.append(bits)
        in_specs.append(pl.BlockSpec((tm_eff, tk_eff), lambda i, k: (i, k)))

    vmem_limit = int(min(max(2 * tiles_bytes(tm_eff, tk_eff), 32 << 20), budget))

    flops = 4 * M_p * dim_p * inner_p   # two matmuls
    bytes_accessed = int(
        M_p * dim_p * xb                                   # x
        + n_row_blocks * 2 * dim_p * inner_p * xb          # w1+w2 re-streamed per row block
        + (inner_p + dim_p) * 4                            # biases
        + M_p * dim_p * ob)                                # output
    if drop_threshold is not None:
        bytes_accessed += M_p * inner_p * 4                # dropout bits

    kernel = functools.partial(_ffn_kernel,
                               drop_threshold=drop_threshold,
                               keep_scale=float(keep_scale))

    out = pl.pallas_call(
        kernel,
        out_shape=jax.ShapeDtypeStruct((M_p, dim_p), out_dtype),
        grid_spec=pltpu.PrefetchScalarGridSpec(
            num_scalar_prefetch=0,
            grid=(n_row_blocks, n_k_blocks),
            in_specs=in_specs,
            out_specs=pl.BlockSpec((tm_eff, dim_p), lambda i, k: (i, 0)),
            scratch_shapes=[pltpu.VMEM((tm_eff, dim_p), jnp.float32)],
        ),
        compiler_params=pltpu.CompilerParams(
            dimension_semantics=("parallel", "arbitrary"),
            vmem_limit_bytes=vmem_limit),
        cost_estimate=pl.CostEstimate(flops=flops, transcendentals=0,
                                      bytes_accessed=bytes_accessed),
    )(*inputs)

    return out[:M, :dim].reshape(orig_shape)


def init_params(key, dim, inner_layer_dim, dtype=jnp.float32):
    """Deterministic init mimicking nn.Linear (uniform(-1/sqrt(fan_in), +))."""
    k1, k2, k3, k4 = jax.random.split(key, 4)
    bound1 = 1.0 / jnp.sqrt(dim)
    bound2 = 1.0 / jnp.sqrt(inner_layer_dim)
    # Stored pre-transposed relative to PyTorch: w1 is (dim, inner), w2 is (inner, dim).
    w1 = jax.random.uniform(k1, (dim, inner_layer_dim), dtype, -bound1, bound1)
    b1 = jax.random.uniform(k2, (inner_layer_dim,), dtype, -bound1, bound1)
    w2 = jax.random.uniform(k3, (inner_layer_dim, dim), dtype, -bound2, bound2)
    b2 = jax.random.uniform(k4, (dim,), dtype, -bound2, bound2)
    return w1, b1, w2, b2


if __name__ == "__main__":
    dim = 32
    inner_layer_dim = 64
    dropout_rate = 0.1
    batch, seq = 2, 8

    key = jax.random.PRNGKey(0)
    kx, kp = jax.random.split(key)
    x = jax.random.normal(kx, (batch, seq, dim), jnp.float32)
    w1, b1, w2, b2 = init_params(kp, dim, inner_layer_dim)

    # Weights padded + cast to bf16 ONCE, reused for every forward call.
    params = prepare_params(w1, b1, w2, b2)

    # Eval-mode forward (dropout = identity), matching module.eval() semantics.
    out = feed_forward(x, params, dropout_rate=dropout_rate, training=False)
    out = jax.block_until_ready(out)

    # Pure-JAX f32 reference (eval mode). The kernel uses bf16 MXU inputs with
    # f32 accumulation, so allow ~1% tolerance.
    ref = jnp.maximum(x @ w1 + b1, 0.0) @ w2 + b2
    assert out.shape == ref.shape
    assert jnp.allclose(out, ref, atol=5e-2, rtol=5e-2), "mismatch vs reference"

    # Training-mode forward exercises the dropout path (mask statistics match
    # torch's dropout; the exact mask differs from torch's RNG stream).
    out_tr = feed_forward(x, params, dropout_rate=dropout_rate,
                          training=True, seed=42)
    out_tr = jax.block_until_ready(out_tr)
    assert out_tr.shape == x.shape and bool(jnp.all(jnp.isfinite(out_tr)))

    print("KERNEL_OK")
</pallas_src>

<mosaic_0001>
module attributes {stable_mosaic.version = 11 : i64} {
  func.func @_ffn_kernel(%arg0: i32, %arg1: i32, %arg2: memref<8x128xbf16, #tpu.memory_space<vmem>>, %arg3: memref<128x128xbf16, #tpu.memory_space<vmem>>, %arg4: memref<1x128xf32, #tpu.memory_space<vmem>>, %arg5: memref<128x128xbf16, #tpu.memory_space<vmem>>, %arg6: memref<1x128xf32, #tpu.memory_space<vmem>>, %arg7: memref<8x128xf32, #tpu.memory_space<vmem>>, %arg8: memref<8x128xf32, #tpu.memory_space<vmem>>) attributes {dimension_semantics = [#tpu.dimension_semantics<parallel>, #tpu.dimension_semantics<arbitrary>], iteration_bounds = array<i64: 2, 1>, scalar_prefetch = 0 : i64, scratch_operands = 1 : i64, tpu.core_type = #tpu.core_type<tc>, window_params = [{transform_indices = @transform_0, window_bounds = array<i64: 8, 128>}, {transform_indices = @transform_1, window_bounds = array<i64: 128, 128>}, {transform_indices = @transform_2, window_bounds = array<i64: 1, 128>}, {transform_indices = @transform_3, window_bounds = array<i64: 128, 128>}, {pipeline_mode = #tpu.pipeline_mode<synchronous>, transform_indices = @transform_4, window_bounds = array<i64: 1, 128>}, {transform_indices = @transform_5, window_bounds = array<i64: 8, 128>}]} {
    %c0_i32 = arith.constant 0 : i32
    %0 = arith.cmpi eq, %arg1, %c0_i32 : i32
    %1 = arith.extui %0 : i1 to i32
    %c0_i32_0 = arith.constant 0 : i32
    %2 = arith.cmpi ne, %1, %c0_i32_0 : i32
    scf.if %2 {
      %cst_16 = arith.constant 0.000000e+00 : f32
      %20 = vector.broadcast %cst_16 : f32 to vector<8x128xf32>
      %c0_17 = arith.constant 0 : index
      %c0_18 = arith.constant 0 : index
      %21 = vector.load %arg8[%c0_17, %c0_18] : memref<8x128xf32, #tpu.memory_space<vmem>>, vector<8x128xf32>
      tpu.vector_store %arg8[%c0_17, %c0_18], %20 {strides = array<i32>} : memref<8x128xf32, #tpu.memory_space<vmem>>, vector<8x128xf32>,
    } else {
    }
    %c0 = arith.constant 0 : index
    %c0_1 = arith.constant 0 : index
    %3 = vector.load %arg2[%c0, %c0_1] : memref<8x128xbf16, #tpu.memory_space<vmem>>, vector<8x128xbf16>
    %c0_2 = arith.constant 0 : index
    %c0_3 = arith.constant 0 : index
    %4 = vector.load %arg3[%c0_2, %c0_3] : memref<128x128xbf16, #tpu.memory_space<vmem>>, vector<128x128xbf16>
    %cst = arith.constant dense<0.000000e+00> : vector<8x128xf32>
    %5 = tpu.matmul %3, %4, %cst {dimension_numbers = #tpu.dot_dimension_numbers<[1], [0], [0], [1], [0, 0, 1, 1], [], []>} : vector<8x128xbf16>, vector<128x128xbf16>, vector<8x128xf32> -> vector<8x128xf32>
    %c0_4 = arith.constant 0 : index
    %c0_5 = arith.constant 0 : index
    %6 = vector.load %arg4[%c0_4, %c0_5] : memref<1x128xf32, #tpu.memory_space<vmem>>, vector<1x128xf32>
    %7 = vector.broadcast %6 : vector<1x128xf32> to vector<8x128xf32>
    %8 = arith.addf %5, %7 : vector<8x128xf32>
    %cst_6 = arith.constant 0.000000e+00 : f32
    %9 = vector.broadcast %cst_6 : f32 to vector<8x128xf32>
    %10 = arith.maximumf %8, %9 : vector<8x128xf32>
    %c0_7 = arith.constant 0 : index
    %c0_8 = arith.constant 0 : index
    %11 = vector.load %arg8[%c0_7, %c0_8] : memref<8x128xf32, #tpu.memory_space<vmem>>, vector<8x128xf32>
    %12 = arith.truncf %10 : vector<8x128xf32> to vector<8x128xbf16>
    %c0_9 = arith.constant 0 : index
    %c0_10 = arith.constant 0 : index
    %13 = vector.load %arg5[%c0_9, %c0_10] : memref<128x128xbf16, #tpu.memory_space<vmem>>, vector<128x128xbf16>
    %cst_11 = arith.constant dense<0.000000e+00> : vector<8x128xf32>
    %14 = tpu.matmul %12, %13, %cst_11 {dimension_numbers = #tpu.dot_dimension_numbers<[1], [0], [0], [1], [0, 0, 1, 1], [], []>} : vector<8x128xbf16>, vector<128x128xbf16>, vector<8x128xf32> -> vector<8x128xf32>
    %15 = arith.addf %11, %14 : vector<8x128xf32>
    %c0_12 = arith.constant 0 : index
    %c0_13 = arith.constant 0 : index
    %16 = vector.load %arg8[%c0_12, %c0_13] : memref<8x128xf32, #tpu.memory_space<vmem>>, vector<8x128xf32>
    tpu.vector_store %arg8[%c0_12, %c0_13], %15 {strides = array<i32>} : memref<8x128xf32, #tpu.memory_space<vmem>>, vector<8x128xf32>,
    %c0_i32_14 = arith.constant 0 : i32
    %17 = arith.cmpi eq, %arg1, %c0_i32_14 : i32
    %18 = arith.extui %17 : i1 to i32
    %c0_i32_15 = arith.constant 0 : i32
    %19 = arith.cmpi ne, %18, %c0_i32_15 : i32
    scf.if %19 {
      %c0_16 = arith.constant 0 : index
      %c0_17 = arith.constant 0 : index
      %20 = vector.load %arg8[%c0_16, %c0_17] : memref<8x128xf32, #tpu.memory_space<vmem>>, vector<8x128xf32>
      %c0_18 = arith.constant 0 : index
      %c0_19 = arith.constant 0 : index
      %21 = vector.load %arg6[%c0_18, %c0_19] : memref<1x128xf32, #tpu.memory_space<vmem>>, vector<1x128xf32>
      %22 = vector.broadcast %21 : vector<1x128xf32> to vector<8x128xf32>
      %23 = arith.addf %20, %22 : vector<8x128xf32>
      %c0_20 = arith.constant 0 : index
      %c0_21 = arith.constant 0 : index
      %24 = vector.load %arg7[%c0_20, %c0_21] : memref<8x128xf32, #tpu.memory_space<vmem>>, vector<8x128xf32>
      tpu.vector_store %arg7[%c0_20, %c0_21], %23 {strides = array<i32>} : memref<8x128xf32, #tpu.memory_space<vmem>>, vector<8x128xf32>,
    } else {
    }
    return
  }
  func.func @transform_0(%arg0: i32, %arg1: i32) -> (i32, i32) {
    %c0_i32 = arith.constant 0 : i32
    %c0_i32_0 = arith.constant 0 : i32
    return %arg0, %c0_i32 : i32, i32
  }
  func.func @transform_1(%arg0: i32, %arg1: i32) -> (i32, i32) {
    %c0_i32 = arith.constant 0 : i32
    %c0_i32_0 = arith.constant 0 : i32
    return %c0_i32, %arg1 : i32, i32
  }
  func.func @transform_2(%arg0: i32, %arg1: i32) -> (i32, i32) {
    %c0_i32 = arith.constant 0 : i32
    %c0_i32_0 = arith.constant 0 : i32
    return %c0_i32, %arg1 : i32, i32
  }
  func.func @transform_3(%arg0: i32, %arg1: i32) -> (i32, i32) {
    %c0_i32 = arith.constant 0 : i32
    %c0_i32_0 = arith.constant 0 : i32
    return %arg1, %c0_i32 : i32, i32
  }
  func.func @transform_4(%arg0: i32, %arg1: i32) -> (i32, i32) {
    %c0_i32 = arith.constant 0 : i32
    %c0_i32_0 = arith.constant 0 : i32
    %c0_i32_1 = arith.constant 0 : i32
    return %c0_i32, %c0_i32_0 : i32, i32
  }
  func.func @transform_5(%arg0: i32, %arg1: i32) -> (i32, i32) {
    %c0_i32 = arith.constant 0 : i32
    %c0_i32_0 = arith.constant 0 : i32
    return %arg0, %c0_i32 : i32, i32
  }
}

</mosaic_0001>

<llo_original>
// kernel: tpu_custom_call.1
$region0: #{tpu_custom_call.1}
  #allocation0 [shape = 'u32[]', space=smem, size = 0x4, offset = 0x4, fixed_abs, tag = 'smem constant byte address 0x4 - core index']
  #allocation1 [shape = 'u32[72,128]{1,0:T(1,128)}', space=vmem, size = 0x9000, scoped, tag = 'internal scratch']
  #allocation2 [shape = 'f32[8,128]{1,0:T(8,128)}', space=vmem, size = 0x1000, scoped, tag = 'scratch operand']
  %s0 = inlined_call_operand.hbm [shape: bf16[16,128], index: 0, kind: input, shape index: {}]
  %s1 = inlined_call_operand.hbm [shape: bf16[128,128], index: 1, kind: input, shape index: {}]
  %s2 = inlined_call_operand.vmem [shape: f32[1,128], index: 2, kind: input, shape index: {}]
  %s3 = inlined_call_operand.hbm [shape: bf16[128,128], index: 3, kind: input, shape index: {}]
  %s4 = inlined_call_operand.vmem [shape: f32[1,128], index: 4, kind: input, shape index: {}]
  %s5 = inlined_call_operand.hbm [shape: f32[16,128], index: 5, kind: output, shape index: {}]
  %s6 = sld [smem:[#allocation0]]
  $region73: #{tpu_custom_call.1} parent=0
    _
  %s8 = ssub.s32 1, %s6
  %s9 = scalar_select 0, %s8, %s6
  $region1: #{tpu_custom_call.1} parent=0
    #allocation3 [shape = 'u8[4096]{0}', space=vmem, size = 0x1000, scoped, tag = 'input window, operand 0']
    #allocation4 [shape = 's32[2]{0}', space=sflag, size = 0x8, scoped, tag = 'scoped memory for tpu_custom_call.1']
    #allocation5 [shape = 's32[2]{0}', space=sflag, size = 0x8, scoped, tag = 'scoped memory for tpu_custom_call.1']
    #allocation6 [shape = 'u8[32768]{0}', space=vmem, size = 0x8000, scoped, tag = 'input window, operand 1, single buffered']
    #allocation7 [shape = 's32[1]{0}', space=sflag, size = 0x4, scoped, tag = 'scoped memory for tpu_custom_call.1']
    #allocation8 [shape = 'u8[32768]{0}', space=vmem, size = 0x8000, scoped, tag = 'input window, operand 3, single buffered']
    #allocation9 [shape = 'u8[8192]{0}', space=vmem, size = 0x2000, scoped, tag = 'output window, operand 0']
    %10 = vsyncpa [#allocation4], 0
    %s11 = scalar_lea.sflag [#allocation4], 1
    %12 = vsyncpa %s11, 0
    %13 = vsyncpa [#allocation7], 0
    %14 = vsyncpa [#allocation5], 0
    %s15 = scalar_lea.sflag [#allocation5], 1
    %16 = vsyncpa %s15, 0
    loop: start=0, step=1, limit=4
    $region2: #{tpu_custom_call.1} parent=1 // loop_pre_header
      _
    $region3: #{tpu_custom_call.1} parent=1 // loop_header
      %s18 = sphi 0, %s22
      %p19 = scmp.ge.s32.totalorder %s18, 4
      %s25 = sphi 0, %s37
      %s26 = sphi 0, %s33
      %s27 = sphi 0, %s25
      %s28 = sphi 0, %s26
      %s29 = sphi 0, %s27
      %s30 = sphi 0, %s28
      %s40 = sphi 0, %s42
      %s43 = sphi 0, %s40
      %s44 = sphi 0, %s43
      %s60 = sphi 0, %s44
      %s66 = sphi 0, %s68
      %s69 = sphi 0, %s66
      %s70 = sphi 0, %s69
      %s86 = sphi 0, %s70
      %s92 = sphi 0, %s94
      %s95 = sphi 0, %s92
      %s96 = sphi 0, %s95
      %s112 = sphi 0, %s96
      %s118 = sphi 0, %s120
      %s121 = sphi 0, %s118
      %s122 = sphi 0, %s121
      %s138 = sphi 0, %s122
      %s142 = sphi 0, %s142
      %s144 = sphi 0, %s142
      %s145 = sphi 0, %s144
      %s159 = sphi 0, %s145
      %s165 = sphi 0, %s167
      %s168 = sphi 0, %s165
      %s169 = sphi 0, %s168
      %s185 = sphi 0, %s169
    $region4: #{tpu_custom_call.1} parent=1 // loop_header_branch
      %21 = sbr.rel (%p19) target = $region8
    $region5: #{tpu_custom_call.1} parent=1 // loop_body
      %s23 = ssub.s32 %s18, 1
      %s24 = ssub.s32 %s18, 2
      %s31 = sadd.s32 1, %s26
      %p32 = scmp.ge.s32.totalorder %s31, 1
      %s33 = scalar_select %p32, 0, %s31
      %s34 = sadd.s32 1, %s25
      %s35 = scalar_select %p32, %s34, %s25
      %p36 = scmp.ge.s32.totalorder %s35, 2
      %s37 = scalar_select %p36, 0, %s35
      %s38 = ssub.s32 %s25, %s37
      %p39 = scmp.eq.s32.totalorder %s38, 0
      %s41 = sadd.s32 %s40, 1
      %s42 = scalar_select %p39, %s40, %s41
      %p45 = pneg %p39
      %p46 = scmp.eq.s32.totalorder %s18, 1
      %p47 = por %p45, %p46
      %p48 = scmp.ne.s32.totalorder %s40, %s43
      %p49 = scmp.eq.s32.totalorder %s18, 0
      %p50 = por %p48, %p49
      %p51 = scmp.ne.s32.totalorder %s40, %s43
      %p52 = scmp.eq.s32.totalorder %s23, 1
      %p53 = por %p51, %p52
      %p54 = scmp.ne.s32.totalorder %s43, %s44
      %p55 = scmp.eq.s32.totalorder %s23, 0
      %p56 = por %p54, %p55
      %p57 = scmp.ne.s32.totalorder %s43, %s44
      %p58 = scmp.eq.s32.totalorder %s24, 1
      %p59 = por %p57, %p58
      %p61 = scmp.ne.s32.totalorder %s44, %s60
      %p62 = scmp.eq.s32.totalorder %s24, 0
      %p63 = por %p61, %p62
      %s64 = ssub.s32 %s26, %s33
      %p65 = scmp.eq.s32.totalorder %s64, 0
      %s67 = sadd.s32 %s66, 1
      %s68 = scalar_select %p65, %s66, %s67
      %p71 = pneg %p65
      %p72 = scmp.eq.s32.totalorder %s18, 1
      %p73 = por %p71, %p72
      %p74 = scmp.ne.s32.totalorder %s66, %s69
      %p75 = scmp.eq.s32.totalorder %s18, 0
      %p76 = por %p74, %p75
      %p77 = scmp.ne.s32.totalorder %s66, %s69
      %p78 = scmp.eq.s32.totalorder %s23, 1
      %p79 = por %p77, %p78
      %p80 = scmp.ne.s32.totalorder %s69, %s70
      %p81 = scmp.eq.s32.totalorder %s23, 0
      %p82 = por %p80, %p81
      %p83 = scmp.ne.s32.totalorder %s69, %s70
      %p84 = scmp.eq.s32.totalorder %s24, 1
      %p85 = por %p83, %p84
      %p87 = scmp.ne.s32.totalorder %s70, %s86
      %p88 = scmp.eq.s32.totalorder %s24, 0
      %p89 = por %p87, %p88
      %s90 = ssub.s32 %s26, %s33
      %p91 = scmp.eq.s32.totalorder %s90, 0
      %s93 = sadd.s32 %s92, 1
      %s94 = scalar_select %p91, %s92, %s93
      %p97 = pneg %p91
      %p98 = scmp.eq.s32.totalorder %s18, 1
      %p99 = por %p97, %p98
      %p100 = scmp.ne.s32.totalorder %s92, %s95
      %p101 = scmp.eq.s32.totalorder %s18, 0
      %p102 = por %p100, %p101
      %p103 = scmp.ne.s32.totalorder %s92, %s95
      %p104 = scmp.eq.s32.totalorder %s23, 1
      %p105 = por %p103, %p104
      %p106 = scmp.ne.s32.totalorder %s95, %s96
      %p107 = scmp.eq.s32.totalorder %s23, 0
      %p108 = por %p106, %p107
      %p109 = scmp.ne.s32.totalorder %s95, %s96
      %p110 = scmp.eq.s32.totalorder %s24, 1
      %p111 = por %p109, %p110
      %p113 = scmp.ne.s32.totalorder %s96, %s112
      %p114 = scmp.eq.s32.totalorder %s24, 0
      %p115 = por %p113, %p114
      %s116 = ssub.s32 %s26, %s33
      %p117 = scmp.eq.s32.totalorder %s116, 0
      %s119 = sadd.s32 %s118, 1
      %s120 = scalar_select %p117, %s118, %s119
      %p123 = pneg %p117
      %p124 = scmp.eq.s32.totalorder %s18, 1
      %p125 = por %p123, %p124
      %p126 = scmp.ne.s32.totalorder %s118, %s121
      %p127 = scmp.eq.s32.totalorder %s18, 0
      %p128 = por %p126, %p127
      %p129 = scmp.ne.s32.totalorder %s118, %s121
      %p130 = scmp.eq.s32.totalorder %s23, 1
      %p131 = por %p129, %p130
      %p132 = scmp.ne.s32.totalorder %s121, %s122
      %p133 = scmp.eq.s32.totalorder %s23, 0
      %p134 = por %p132, %p133
      %p135 = scmp.ne.s32.totalorder %s121, %s122
      %p136 = scmp.eq.s32.totalorder %s24, 1
      %p137 = por %p135, %p136
      %p139 = scmp.ne.s32.totalorder %s122, %s138
      %p140 = scmp.eq.s32.totalorder %s24, 0
      %p141 = por %p139, %p140
      %s143 = sadd.s32 %s142, 1
      %p146 = scmp.eq.s32.totalorder %s18, 1
      %p147 = scmp.ne.s32.totalorder %s142, %s144
      %p148 = scmp.eq.s32.totalorder %s18, 0
      %p149 = por %p147, %p148
      %p150 = scmp.ne.s32.totalorder %s142, %s144
      %p151 = scmp.eq.s32.totalorder %s23, 1
      %p152 = por %p150, %p151
      %p153 = scmp.ne.s32.totalorder %s144, %s145
      %p154 = scmp.eq.s32.totalorder %s23, 0
      %p155 = por %p153, %p154
      %p156 = scmp.ne.s32.totalorder %s144, %s145
      %p157 = scmp.eq.s32.totalorder %s24, 1
      %p158 = por %p156, %p157
      %p160 = scmp.ne.s32.totalorder %s145, %s159
      %p161 = scmp.eq.s32.totalorder %s24, 0
      %p162 = por %p160, %p161
      %s163 = ssub.s32 %s25, %s37
      %p164 = scmp.eq.s32.totalorder %s163, 0
      %s166 = sadd.s32 %s165, 1
      %s167 = scalar_select %p164, %s165, %s166
      %p170 = pneg %p164
      %p171 = scmp.eq.s32.totalorder %s18, 1
      %p172 = por %p170, %p171
      %p173 = scmp.ne.s32.totalorder %s165, %s168
      %p174 = scmp.eq.s32.totalorder %s18, 0
      %p175 = por %p173, %p174
      %p176 = scmp.ne.s32.totalorder %s165, %s168
      %p177 = scmp.eq.s32.totalorder %s23, 1
      %p178 = por %p176, %p177
      %p179 = scmp.ne.s32.totalorder %s168, %s169
      %p180 = scmp.eq.s32.totalorder %s23, 0
      %p181 = por %p179, %p180
      %p182 = scmp.ne.s32.totalorder %s168, %s169
      %p183 = scmp.eq.s32.totalorder %s24, 1
      %p184 = por %p182, %p183
      %p186 = scmp.ne.s32.totalorder %s169, %s185
      %p187 = scmp.eq.s32.totalorder %s24, 0
      %p188 = por %p186, %p187
      %p189 = scmp.le.s32.totalorder 1, %s18
      %p190 = scmp.lt.s32.totalorder %s18, 3
      %p191 = pnand %p189, %p190
      %p192 = pneg %p191
      // Predicated region
      $region9: #{tpu_custom_call.1} parent=5 // pred_check
        _
      $region10: #{tpu_custom_call.1} parent=5 // pred_check_branch
        %194 = sbr.rel (%p191) target = $region12
      $region11: #{tpu_custom_call.1} parent=5 // pred_region
        %s195 = ssub.s32 %s18, 1
        // Predicated region
        $region13: #{tpu_custom_call.1} parent=11 // pred_check
          %p196 = pneg %p82
        $region14: #{tpu_custom_call.1} parent=11 // pred_check_branch
          %198 = sbr.rel (%p196) target = $region16
        $region15: #{tpu_custom_call.1} parent=11 // pred_region
          %200 = vsyncadd [#allocation7], 0
          %s201 = smul.addr %s28, 4
          %s202 = scalar_lea.hbm %s1, %s201
          %s203 = sshll.u32 %s202, 4
          %s204 = int_to_ptr.hbm [resolvable:$true] %s203
          %s205 = sshll.u32 [#allocation6], 4
          %s206 = int_to_ptr.vmem [resolvable:$true] %s205
          %211 = dma.hbm_to_vmem [thread:$0]  %s204, 1024, %s206, [#allocation7], 64, 64, 4
        $region16: #{tpu_custom_call.1} parent=11 // pred_fallthru
          _
        // Predicated region
        $region17: #{tpu_custom_call.1} parent=11 // pred_check
          %p212 = pneg %p108
        $region18: #{tpu_custom_call.1} parent=11 // pred_check_branch
          %214 = sbr.rel (%p212) target = $region20
        $region19: #{tpu_custom_call.1} parent=11 // pred_region
          %p215 = scmp.lt.s32.totalorder %s28, 0
          %s216 = scalar_select %p215, %s28, 0
          %s217 = scalar_lea.vmem %s2, %s216
        $region20: #{tpu_custom_call.1} parent=11 // pred_fallthru
          _
        // Predicated region
        $region21: #{tpu_custom_call.1} parent=11 // pred_check
          %p218 = pneg %p134
        $region22: #{tpu_custom_call.1} parent=11 // pred_check_branch
          %220 = sbr.rel (%p218) target = $region24
        $region23: #{tpu_custom_call.1} parent=11 // pred_region
          %s221 = smul.u32 16, %s28
          %223 = vsyncadd [#allocation7], 0
          %s224 = smul.addr %s221, 4
          %s225 = scalar_lea.hbm %s3, %s224
          %s226 = sshll.u32 %s225, 4
          %s227 = int_to_ptr.hbm [resolvable:$true] %s226
          %s228 = sshll.u32 [#allocation8], 4
          %s229 = int_to_ptr.vmem [resolvable:$true] %s228
          %234 = dma.hbm_to_vmem [thread:$0]  %s227, 1024, %s229, [#allocation7], 64, 64, 4
        $region24: #{tpu_custom_call.1} parent=11 // pred_fallthru
          _
        // Predicated region
        $region25: #{tpu_custom_call.1} parent=11 // pred_check
          %p235 = pneg %p155
        $region26: #{tpu_custom_call.1} parent=11 // pred_check_branch
          %237 = sbr.rel (%p235) target = $region28
        $region27: #{tpu_custom_call.1} parent=11 // pred_region
          _
        $region28: #{tpu_custom_call.1} parent=11 // pred_fallthru
          _
      $region12: #{tpu_custom_call.1} parent=5 // pred_fallthru
        _
      %p238 = scmp.lt.s32.totalorder %s18, 2
      // Predicated region
      $region29: #{tpu_custom_call.1} parent=5 // pred_check
        %p239 = pneg %p238
      $region30: #{tpu_custom_call.1} parent=5 // pred_check_branch
        %241 = sbr.rel (%p239) target = $region32
      $region31: #{tpu_custom_call.1} parent=5 // pred_region
        // Predicated region
        $region33: #{tpu_custom_call.1} parent=31 // pred_check
          %p242 = pneg %p50
        $region34: #{tpu_custom_call.1} parent=31 // pred_check_branch
          %244 = sbr.rel (%p242) target = $region36
        $region35: #{tpu_custom_call.1} parent=31 // pred_region
          %s245 = sand.u32 %s40, 1
          %s246 = scalar_lea.sflag [#allocation4], %s245
          %s247 = sand.u32 %s40, 1
          %s248 = smul.addr %s247, 4
          %s249 = scalar_lea.vmem [#allocation3], %s248
          %251 = vsyncadd %s246, 0
          %s252 = smul.addr %s25, 4
          %s253 = scalar_lea.hbm %s0, %s252
          %s255 = sshll.u32 %s253, 4
          %s256 = int_to_ptr.hbm [resolvable:$true] %s255
          %s257 = sshll.u32 %s249, 4
          %s258 = int_to_ptr.vmem [resolvable:$true] %s257
          %260 = dma.hbm_to_vmem [thread:$0]  %s256, 64, %s258, %s246
        $region36: #{tpu_custom_call.1} parent=31 // pred_fallthru
          _
      $region32: #{tpu_custom_call.1} parent=5 // pred_fallthru
        _
      %p261 = scmp.le.s32.totalorder 1, %s18
      %p262 = scmp.lt.s32.totalorder %s18, 3
      %p263 = pnand %p261, %p262
      %p264 = pneg %p263
      // Predicated region
      $region37: #{tpu_custom_call.1} parent=5 // pred_check
        _
      $region38: #{tpu_custom_call.1} parent=5 // pred_check_branch
        %266 = sbr.rel (%p263) target = $region40
      $region39: #{tpu_custom_call.1} parent=5 // pred_region
        %s267 = ssub.s32 %s18, 1
        %s268 = sand.u32 %s43, 1
        %s269 = scalar_lea.sflag [#allocation4], %s268
        %s270 = sand.u32 %s43, 1
        %s271 = smul.addr %s270, 4
        %s272 = scalar_lea.vmem [#allocation3], %s271
        // Predicated region
        $region41: #{tpu_custom_call.1} parent=39 // pred_check
          %p273 = pneg %p56
        $region42: #{tpu_custom_call.1} parent=39 // pred_check_branch
          %275 = sbr.rel (%p273) target = $region44
        $region43: #{tpu_custom_call.1} parent=39 // pred_region
          %277 = dma.done %s269, 64
        $region44: #{tpu_custom_call.1} parent=39 // pred_fallthru
          _
        // Predicated region
        $region45: #{tpu_custom_call.1} parent=39 // pred_check
          %p278 = pneg %p82
        $region46: #{tpu_custom_call.1} parent=39 // pred_check_branch
          %280 = sbr.rel (%p278) target = $region48
        $region47: #{tpu_custom_call.1} parent=39 // pred_region
          %282 = dma.done [#allocation7], 1024
        $region48: #{tpu_custom_call.1} parent=39 // pred_fallthru
          _
        // Predicated region
        $region49: #{tpu_custom_call.1} parent=39 // pred_check
          %p283 = pneg %p134
        $region50: #{tpu_custom_call.1} parent=39 // pred_check_branch
          %285 = sbr.rel (%p283) target = $region52
        $region51: #{tpu_custom_call.1} parent=39 // pred_region
          %287 = dma.done [#allocation7], 1024
        $region52: #{tpu_custom_call.1} parent=39 // pred_fallthru
          _
        %s288 = sand.u32 %s43, 1
        %s289 = scalar_lea.sflag [#allocation4], %s288
        %s290 = sand.u32 %s43, 1
        %s291 = smul.addr %s290, 4
        %s292 = scalar_lea.vmem [#allocation3], %s291
        %p293 = pneg %p56
        %p294 = pneg %p53
        %p295 = pneg %p82
        %p296 = pneg %p79
        %p297 = scmp.lt.s32.totalorder %s28, 0
        %s298 = scalar_select %p297, %s28, 0
        %s299 = scalar_lea.vmem %s2, %s298
        %p300 = pneg %p108
        %p301 = pneg %p105
        %p302 = pneg %p134
        %p303 = pneg %p131
        %p304 = pneg %p155
        %p305 = pneg %p152
        %p306 = pneg %p181
        %p307 = pneg %p178
        %s308 = sand.u32 %s168, 1
        %s309 = scalar_lea.sflag [#allocation5], %s308
        %s310 = sand.u32 %s168, 1
        %s311 = smul.addr %s310, 8
        %s312 = scalar_lea.vmem [#allocation9], %s311
        %p313 = scmp.lt.s32.totalorder %s28, 0
        %s314 = scalar_select %p313, %s28, 0
        %s315 = scalar_lea.vmem %s2, %s314
        %s316 = smul.u32 16, %s28
        %p317 = scmp.eq.s32.totalorder %s28, 0
        // Predicated region
        $region53: #{tpu_custom_call.1} parent=39 // pred_check
          %p318 = pneg %p317
        $region54: #{tpu_custom_call.1} parent=39 // pred_check_branch
          %320 = sbr.rel (%p318) target = $region56
        $region55: #{tpu_custom_call.1} parent=39 // pred_region
          %321 = vst [vmem:[#allocation2] sm:$0xff] 0.0
        $region56: #{tpu_custom_call.1} parent=39 // pred_fallthru
          _
        %v322 = vld [vmem:[%s272] sm:$0xf]
        %v323 = vld [vmem:[#allocation6] sm:$0xf]
        %v324 = vld [vmem:[#allocation6 + $0x4] sm:$0xf]
        %v325 = vld [vmem:[#allocation6 + $0x8] sm:$0xf]
        %v326 = vld [vmem:[#allocation6 + $0xc] sm:$0xf]
        %v327 = vld [vmem:[#allocation6 + $0x10] sm:$0xf]
        %v328 = vld [vmem:[#allocation6 + $0x14] sm:$0xf]
        %v329 = vld [vmem:[#allocation6 + $0x18] sm:$0xf]
        %v330 = vld [vmem:[#allocation6 + $0x1c] sm:$0xf]
        %v331 = vld [vmem:[#allocation6 + $0x20] sm:$0xf]
        %v332 = vld [vmem:[#allocation6 + $0x24] sm:$0xf]
        %v333 = vld [vmem:[#allocation6 + $0x28] sm:$0xf]
        %v334 = vld [vmem:[#allocation6 + $0x2c] sm:$0xf]
        %v335 = vld [vmem:[#allocation6 + $0x30] sm:$0xf]
        %v336 = vld [vmem:[#allocation6 + $0x34] sm:$0xf]
        %v337 = vld [vmem:[#allocation6 + $0x38] sm:$0xf]
        %v338 = vld [vmem:[#allocation6 + $0x3c] sm:$0xf]
        %v339 = vld [vmem:[%s315] sm:$0x1]
        %v341 = vperm.slane %v339, 0
        %v359 = vunpack.c.l.b16 %v323
        %v360 = vunpack.c.l.b16 %v324
        %v361 = vunpack.c.l.b16 %v325
        %v362 = vunpack.c.l.b16 %v326
        %v363 = vunpack.c.l.b16 %v327
        %v364 = vunpack.c.l.b16 %v328
        %v365 = vunpack.c.l.b16 %v329
        %v366 = vunpack.c.l.b16 %v330
        %v367 = vunpack.c.l.b16 %v331
        %v368 = vunpack.c.l.b16 %v332
        %v369 = vunpack.c.l.b16 %v333
        %v370 = vunpack.c.l.b16 %v334
        %v371 = vunpack.c.l.b16 %v335
        %v372 = vunpack.c.l.b16 %v336
        %v373 = vunpack.c.l.b16 %v337
        %v374 = vunpack.c.l.b16 %v338
        %v375 = vpack.c.b16 %v360, %v359
        %v376 = vpack.c.b16 %v362, %v361
        %v377 = vpack.c.b16 %v364, %v363
        %v378 = vpack.c.b16 %v366, %v365
        %v379 = vpack.c.b16 %v368, %v367
        %v380 = vpack.c.b16 %v370, %v369
        %v381 = vpack.c.b16 %v372, %v371
        %v382 = vpack.c.b16 %v374, %v373
        %391 = vmatpush.bf16.msra.mxu0 %v382
        %392 = vmatpush.bf16.msra.mxu0 %v381
        %393 = vmatpush.bf16.msra.mxu0 %v380
        %394 = vmatpush.bf16.msra.mxu0 %v379
        %395 = vmatpush.bf16.msra.mxu0 %v378
        %396 = vmatpush.bf16.msra.mxu0 %v377
        %397 = vmatpush.bf16.msra.mxu0 %v376
        %398 = vmatpush.bf16.msra.mxu0 %v375
        %399 = vmatmul.bf16.gmra.mxu0 %v322
        %v400 = vpop.f32.mrf.mxu0
        %v401 = vadd.f32 %v341, %v400
        %v402 = vpop.f32.mrf.mxu0
        %403 = vdwg.mxu0
        %v404 = vmax.f32 %v401, 0.0
        %v405 = vld [vmem:[#allocation2] sm:$0xff]
        %v406 = vpack.c.bf16 %v404, %v404
        %v407 = vld [vmem:[#allocation8] sm:$0xf]
        %v408 = vld [vmem:[#allocation8 + $0x4] sm:$0xf]
        %v409 = vld [vmem:[#allocation8 + $0x8] sm:$0xf]
        %v410 = vld [vmem:[#allocation8 + $0xc] sm:$0xf]
        %v411 = vld [vmem:[#allocation8 + $0x10] sm:$0xf]
        %v412 = vld [vmem:[#allocation8 + $0x14] sm:$0xf]
        %v413 = vld [vmem:[#allocation8 + $0x18] sm:$0xf]
        %v414 = vld [vmem:[#allocation8 + $0x1c] sm:$0xf]
        %v415 = vld [vmem:[#allocation8 + $0x20] sm:$0xf]
        %v416 = vld [vmem:[#allocation8 + $0x24] sm:$0xf]
        %v417 = vld [vmem:[#allocation8 + $0x28] sm:$0xf]
        %v418 = vld [vmem:[#allocation8 + $0x2c] sm:$0xf]
        %v419 = vld [vmem:[#allocation8 + $0x30] sm:$0xf]
        %v420 = vld [vmem:[#allocation8 + $0x34] sm:$0xf]
        %v421 = vld [vmem:[#allocation8 + $0x38] sm:$0xf]
        %v422 = vld [vmem:[#allocation8 + $0x3c] sm:$0xf]
        %v439 = vunpack.c.l.b16 %v407
        %v440 = vunpack.c.l.b16 %v408
        %v441 = vunpack.c.l.b16 %v409
        %v442 = vunpack.c.l.b16 %v410
        %v443 = vunpack.c.l.b16 %v411
        %v444 = vunpack.c.l.b16 %v412
        %v445 = vunpack.c.l.b16 %v413
        %v446 = vunpack.c.l.b16 %v414
        %v447 = vunpack.c.l.b16 %v415
        %v448 = vunpack.c.l.b16 %v416
        %v449 = vunpack.c.l.b16 %v417
        %v450 = vunpack.c.l.b16 %v418
        %v451 = vunpack.c.l.b16 %v419
        %v452 = vunpack.c.l.b16 %v420
        %v453 = vunpack.c.l.b16 %v421
        %v454 = vunpack.c.l.b16 %v422
        %v455 = vpack.c.b16 %v440, %v439
        %v456 = vpack.c.b16 %v442, %v441
        %v457 = vpack.c.b16 %v444, %v443
        %v458 = vpack.c.b16 %v446, %v445
        %v459 = vpack.c.b16 %v448, %v447
        %v460 = vpack.c.b16 %v450, %v449
        %v461 = vpack.c.b16 %v452, %v451
        %v462 = vpack.c.b16 %v454, %v453
        %471 = vmatpush.bf16.msra.mxu0 %v462
        %472 = vmatpush.bf16.msra.mxu0 %v461
        %473 = vmatpush.bf16.msra.mxu0 %v460
        %474 = vmatpush.bf16.msra.mxu0 %v459
        %475 = vmatpush.bf16.msra.mxu0 %v458
        %476 = vmatpush.bf16.msra.mxu0 %v457
        %477 = vmatpush.bf16.msra.mxu0 %v456
        %478 = vmatpush.bf16.msra.mxu0 %v455
        %479 = vmatmul.bf16.gmra.mxu0 %v406
        %v480 = vpop.f32.mrf.mxu0
        %v481 = vadd.f32 0.0, %v480
        %v482 = vpop.f32.mrf.mxu0
        %483 = vdwg.mxu0
        %v484 = vadd.f32 %v405, %v481
        %485 = vst [vmem:[#allocation2] sm:$0xff] %v484
        // Predicated region
        $region57: #{tpu_custom_call.1} parent=39 // pred_check
          %p486 = pneg %p317
        $region58: #{tpu_custom_call.1} parent=39 // pred_check_branch
          %488 = sbr.rel (%p486) target = $region60
        $region59: #{tpu_custom_call.1} parent=39 // pred_region
          %v489 = vld [vmem:[#allocation2] sm:$0xff]
          %v490 = vld [vmem:[%s4] sm:$0x1]
          %v492 = vperm.slane %v490, 0
          %v494 = vadd.f32 %v489, %v492
          %495 = vst [vmem:[%s312] sm:$0xff] %v494
        $region60: #{tpu_custom_call.1} parent=39 // pred_fallthru
          _
        %s496 = sand.u32 %s168, 1
        %s497 = scalar_lea.sflag [#allocation5], %s496
        %s498 = sand.u32 %s168, 1
        %s499 = smul.addr %s498, 8
        %s500 = scalar_lea.vmem [#allocation9], %s499
        // Predicated region
        $region61: #{tpu_custom_call.1} parent=39 // pred_check
          %p501 = pneg %p178
        $region62: #{tpu_custom_call.1} parent=39 // pred_check_branch
          %503 = sbr.rel (%p501) target = $region64
        $region63: #{tpu_custom_call.1} parent=39 // pred_region
          %505 = vsyncadd %s497, 0
          %s506 = smul.addr %s27, 8
          %s507 = scalar_lea.hbm %s5, %s506
          %s509 = sshll.u32 %s500, 4
          %s510 = int_to_ptr.vmem [resolvable:$true] %s509
          %s511 = sshll.u32 %s507, 4
          %s512 = int_to_ptr.hbm [resolvable:$true] %s511
          %514 = dma.vmem_to_hbm [thread:$0]  %s510, 128, %s512, %s497
        $region64: #{tpu_custom_call.1} parent=39 // pred_fallthru
          _
      $region40: #{tpu_custom_call.1} parent=5 // pred_fallthru
        _
      %p515 = scmp.le.s32.totalorder 2, %s18
      // Predicated region
      $region65: #{tpu_custom_call.1} parent=5 // pred_check
        %p516 = pneg %p515
      $region66: #{tpu_custom_call.1} parent=5 // pred_check_branch
        %518 = sbr.rel (%p516) target = $region68
      $region67: #{tpu_custom_call.1} parent=5 // pred_region
        %s519 = ssub.s32 %s18, 2
        // Predicated region
        $region69: #{tpu_custom_call.1} parent=67 // pred_check
          %p520 = pneg %p184
        $region70: #{tpu_custom_call.1} parent=67 // pred_check_branch
          %522 = sbr.rel (%p520) target = $region72
        $region71: #{tpu_custom_call.1} parent=67 // pred_region
          %s523 = sand.u32 %s169, 1
          %s524 = scalar_lea.sflag [#allocation5], %s523
          %s525 = sand.u32 %s169, 1
          %s526 = smul.addr %s525, 8
          %s527 = scalar_lea.vmem [#allocation9], %s526
          %529 = dma.done %s524, 128
        $region72: #{tpu_custom_call.1} parent=67 // pred_fallthru
          _
      $region68: #{tpu_custom_call.1} parent=5 // pred_fallthru
        _
    $region6: #{tpu_custom_call.1} parent=1 // loop_footer
      %s22 = sadd.s32 1, %s18
    $region7: #{tpu_custom_call.1} parent=1 // loop_footer_branch
      %17 = sbr.rel target = $region3
    $region8: #{tpu_custom_call.1} parent=1 // loop_exit
      _
    %530 = vsyncpa [#allocation4], 1
    %s531 = scalar_lea.sflag [#allocation4], 1
    %532 = vsyncpa %s531, 1
    %533 = vsyncpa [#allocation7], 1
    %534 = vsyncpa [#allocation5], 1
    %s535 = scalar_lea.sflag [#allocation5], 1
    %536 = vsyncpa %s535, 1

</llo_original>
